<compile_context>
chip_gen: v6e
topology: v6e:2x2x1
jax: 0.10.0
libtpu: 0.0.40
codegen_flags: <defaults>
</compile_context>

<pallas_src>
import jax
import jax.numpy as jnp
from jax.experimental import pallas as pl
from jax.experimental.pallas import tpu as pltpu


def _split_kernel(x1_ref, x2_ref, z1_ref, z2_ref):
    # Each half arrives as its own whole tile (half selected by BlockSpec),
    # so both copies are plain aligned loads/stores with no slicing.
    z1_ref[...] = x1_ref[...]
    z2_ref[...] = x2_ref[...]


def _round_up(x, m):
    return ((x + m - 1) // m) * m


def _largest_divisor_leq(n, k):
    k = max(1, min(n, k))
    for d in range(k, 0, -1):
        if n % d == 0:
            return d
    return 1


def _pick_bm(m, max_bm):
    """Lane tile: full extent if it fits, else a 128-multiple (divisor of M if possible)."""
    if m <= max_bm:
        return m
    cap = max(128, (max_bm // 128) * 128)
    b = cap
    while b >= 128:
        if m % b == 0:           # avoid a masked tail block
            return b
        b -= 128
    return cap                    # tail handled by Pallas masking (perf-only)


def split_forward(z):
    """Pallas equivalent of Split.forward: chunk(2, dim=1), log_det = 0."""
    N, C, H, W = z.shape
    assert C % 2 == 0, "channel dim must be even to chunk into 2"
    c_half = C // 2
    M = H * W
    itemsize = jnp.dtype(z.dtype).itemsize

    # (N, 2, c_half, M): the two halves live on a dedicated axis so BlockSpec
    # index maps (.., 0, ..) / (.., 1, ..) select them — no sublane-offset
    # slicing inside the kernel.
    zr = z.reshape(N, 2, c_half, M)

    # VMEM working set ~= 8 resident tiles (2 input halves + 2 outputs, each
    # double-buffered) of (bn, c_pad, bm).  Keep under ~12 MiB so it is safe
    # even against v5e's 16 MiB scoped-VMEM default.
    vmem_budget = 12 * 1024 * 1024
    sublane = max(1, (8 * 4) // itemsize)          # 8 (f32), 16 (bf16), 32 (int8)
    c_pad = _round_up(c_half, sublane)
    max_bm = max(128, ((vmem_budget // (8 * c_pad * itemsize)) // 128) * 128)
    bm = _pick_bm(M, max_bm)
    grid_m = pl.cdiv(M, bm)

    # Batch tile: aim for ~1 MiB moved per grid step (read + write) to
    # amortize per-step overhead, stay inside the VMEM budget, divide N.
    target_step_bytes = 1 * 1024 * 1024
    want_bn = max(1, target_step_bytes // max(1, 2 * C * bm * itemsize))
    max_bn = max(1, vmem_budget // max(1, 8 * c_pad * bm * itemsize))
    bn = _largest_divisor_leq(N, min(N, want_bn, max_bn))
    # Keep >= 2 parallel grid steps when possible (both v7x TensorCores busy).
    if (N // bn) * grid_m < 2 and N >= 2:
        bn = _largest_divisor_leq(N, N // 2)
    grid_n = N // bn

    out_shapes = (
        jax.ShapeDtypeStruct((N, c_half, M), z.dtype),
        jax.ShapeDtypeStruct((N, c_half, M), z.dtype),
    )

    z1, z2 = pl.pallas_call(
        _split_kernel,
        out_shape=out_shapes,
        grid_spec=pltpu.PrefetchScalarGridSpec(
            num_scalar_prefetch=0,
            grid=(grid_n, grid_m),
            in_specs=[
                # Same array passed twice; each spec picks one half (axis 1
                # block index 0 / 1), squeezed out of the kernel ref.
                pl.BlockSpec((bn, None, c_half, bm), lambda i, j: (i, 0, 0, j)),
                pl.BlockSpec((bn, None, c_half, bm), lambda i, j: (i, 1, 0, j)),
            ],
            out_specs=[
                pl.BlockSpec((bn, c_half, bm), lambda i, j: (i, 0, j)),
                pl.BlockSpec((bn, c_half, bm), lambda i, j: (i, 0, j)),
            ],
        ),
        compiler_params=pltpu.CompilerParams(
            dimension_semantics=("parallel", "parallel"),
            vmem_limit_bytes=32 * 1024 * 1024,
        ),
    )(zr, zr)

    z1 = z1.reshape(N, c_half, H, W)
    z2 = z2.reshape(N, c_half, H, W)
    log_det = jnp.zeros((), dtype=z.dtype)
    return [z1, z2], log_det


if __name__ == "__main__":
    key = jax.random.PRNGKey(0)
    x = jax.random.normal(key, (2, 4, 16, 16), dtype=jnp.float32)

    (z1, z2), log_det = split_forward(x)
    jax.block_until_ready((z1, z2, log_det))

    # Correctness check against plain JAX reference (torch.chunk semantics).
    ref1, ref2 = jnp.split(x, 2, axis=1)
    assert z1.shape == (2, 2, 16, 16) and z2.shape == (2, 2, 16, 16)
    assert jnp.array_equal(z1, ref1) and jnp.array_equal(z2, ref2)
    assert float(log_det) == 0.0

    print("KERNEL_OK")
</pallas_src>

<mosaic_0001>
module attributes {stable_mosaic.version = 11 : i64} {
  func.func @_split_kernel(%arg0: i32, %arg1: i32, %arg2: memref<1x1x2x256xf32, #tpu.memory_space<vmem>>, %arg3: memref<1x1x2x256xf32, #tpu.memory_space<vmem>>, %arg4: memref<1x2x256xf32, #tpu.memory_space<vmem>>, %arg5: memref<1x2x256xf32, #tpu.memory_space<vmem>>) attributes {dimension_semantics = [#tpu.dimension_semantics<parallel>, #tpu.dimension_semantics<parallel>], iteration_bounds = array<i64: 2, 1>, scalar_prefetch = 0 : i64, scratch_operands = 0 : i64, tpu.core_type = #tpu.core_type<tc>, window_params = [{transform_indices = @transform_0, window_bounds = array<i64: 1, 1, 2, 256>}, {transform_indices = @transform_1, window_bounds = array<i64: 1, 1, 2, 256>}, {transform_indices = @transform_2, window_bounds = array<i64: 1, 2, 256>}, {transform_indices = @transform_3, window_bounds = array<i64: 1, 2, 256>}]} {
    %c0 = arith.constant 0 : index
    %c0_0 = arith.constant 0 : index
    %c0_1 = arith.constant 0 : index
    %c0_2 = arith.constant 0 : index
    %0 = vector.load %arg2[%c0, %c0_0, %c0_1, %c0_2] : memref<1x1x2x256xf32, #tpu.memory_space<vmem>>, vector<1x1x2x256xf32>
    %1 = vector.shape_cast %0 : vector<1x1x2x256xf32> to vector<1x2x256xf32>
    %c0_3 = arith.constant 0 : index
    %c0_4 = arith.constant 0 : index
    %c0_5 = arith.constant 0 : index
    %2 = vector.load %arg4[%c0_3, %c0_4, %c0_5] : memref<1x2x256xf32, #tpu.memory_space<vmem>>, vector<1x2x256xf32>
    tpu.vector_store %arg4[%c0_3, %c0_4, %c0_5], %1 {strides = array<i32>} : memref<1x2x256xf32, #tpu.memory_space<vmem>>, vector<1x2x256xf32>,
    %c0_6 = arith.constant 0 : index
    %c0_7 = arith.constant 0 : index
    %c0_8 = arith.constant 0 : index
    %c0_9 = arith.constant 0 : index
    %3 = vector.load %arg3[%c0_6, %c0_7, %c0_8, %c0_9] : memref<1x1x2x256xf32, #tpu.memory_space<vmem>>, vector<1x1x2x256xf32>
    %4 = vector.shape_cast %3 : vector<1x1x2x256xf32> to vector<1x2x256xf32>
    %c0_10 = arith.constant 0 : index
    %c0_11 = arith.constant 0 : index
    %c0_12 = arith.constant 0 : index
    %5 = vector.load %arg5[%c0_10, %c0_11, %c0_12] : memref<1x2x256xf32, #tpu.memory_space<vmem>>, vector<1x2x256xf32>
    tpu.vector_store %arg5[%c0_10, %c0_11, %c0_12], %4 {strides = array<i32>} : memref<1x2x256xf32, #tpu.memory_space<vmem>>, vector<1x2x256xf32>,
    return
  }
  func.func @transform_0(%arg0: i32, %arg1: i32) -> (i32, i32, i32, i32) {
    %c0_i32 = arith.constant 0 : i32
    %c0_i32_0 = arith.constant 0 : i32
    %c0_i32_1 = arith.constant 0 : i32
    return %arg0, %c0_i32, %c0_i32_0, %arg1 : i32, i32, i32, i32
  }
  func.func @transform_1(%arg0: i32, %arg1: i32) -> (i32, i32, i32, i32) {
    %c1_i32 = arith.constant 1 : i32
    %c0_i32 = arith.constant 0 : i32
    %c0_i32_0 = arith.constant 0 : i32
    return %arg0, %c1_i32, %c0_i32, %arg1 : i32, i32, i32, i32
  }
  func.func @transform_2(%arg0: i32, %arg1: i32) -> (i32, i32, i32) {
    %c0_i32 = arith.constant 0 : i32
    %c0_i32_0 = arith.constant 0 : i32
    return %arg0, %c0_i32, %arg1 : i32, i32, i32
  }
  func.func @transform_3(%arg0: i32, %arg1: i32) -> (i32, i32, i32) {
    %c0_i32 = arith.constant 0 : i32
    %c0_i32_0 = arith.constant 0 : i32
    return %arg0, %c0_i32, %arg1 : i32, i32, i32
  }
}

</mosaic_0001>

<llo_original>
// kernel: tpu_custom_call.1
$region0: #{tpu_custom_call.1}
  #allocation0 [shape = 'u32[]', space=smem, size = 0x4, offset = 0x4, fixed_abs, tag = 'smem constant byte address 0x4 - core index']
  #allocation1 [shape = 'u32[144,128]{1,0:T(1,128)}', space=vmem, size = 0x12000, scoped, tag = 'internal scratch']
  %s0 = inlined_call_operand.hbm [shape: f32[2,2,2,256], index: 0, kind: input, shape index: {}]
  %s1 = inlined_call_operand.hbm [shape: f32[2,2,2,256], index: 1, kind: input, shape index: {}]
  %s2 = inlined_call_operand.hbm [shape: f32[2,2,256], index: 2, kind: output, shape index: {0}]
  %s3 = inlined_call_operand.hbm [shape: f32[2,2,256], index: 3, kind: output, shape index: {1}]
  %4 = xla_tuple %s2, %s3
  %s5 = sld [smem:[#allocation0]]
  $region57: #{tpu_custom_call.1} parent=0
    _
  %s7 = ssub.s32 1, %s5
  %s8 = scalar_select 0, %s7, %s5
  $region1: #{tpu_custom_call.1} parent=0
    #allocation2 [shape = 'u8[4096]{0}', space=vmem, size = 0x1000, scoped, tag = 'input window, operand 0']
    #allocation3 [shape = 's32[2]{0}', space=sflag, size = 0x8, scoped, tag = 'scoped memory for tpu_custom_call.1']
    #allocation4 [shape = 's32[2]{0}', space=sflag, size = 0x8, scoped, tag = 'scoped memory for tpu_custom_call.1']
    #allocation5 [shape = 'u8[4096]{0}', space=vmem, size = 0x1000, scoped, tag = 'input window, operand 1']
    #allocation6 [shape = 's32[2]{0}', space=sflag, size = 0x8, scoped, tag = 'scoped memory for tpu_custom_call.1']
    #allocation7 [shape = 'u8[4096]{0}', space=vmem, size = 0x1000, scoped, tag = 'output window, operand 0']
    #allocation8 [shape = 'u8[4096]{0}', space=vmem, size = 0x1000, scoped, tag = 'output window, operand 1']
    #allocation9 [shape = 's32[2]{0}', space=sflag, size = 0x8, scoped, tag = 'scoped memory for tpu_custom_call.1']
    %9 = vsyncpa [#allocation3], 0
    %s10 = scalar_lea.sflag [#allocation3], 1
    %11 = vsyncpa %s10, 0
    %12 = vsyncpa [#allocation6], 0
    %s13 = scalar_lea.sflag [#allocation6], 1
    %14 = vsyncpa %s13, 0
    %15 = vsyncpa [#allocation4], 0
    %s16 = scalar_lea.sflag [#allocation4], 1
    %17 = vsyncpa %s16, 0
    %18 = vsyncpa [#allocation9], 0
    %s19 = scalar_lea.sflag [#allocation9], 1
    %20 = vsyncpa %s19, 0
    loop: start=0, step=1, limit=4
    $region2: #{tpu_custom_call.1} parent=1 // loop_pre_header
      _
    $region3: #{tpu_custom_call.1} parent=1 // loop_header
      %s22 = sphi 0, %s26
      %p23 = scmp.ge.s32.totalorder %s22, 4
      %s29 = sphi 0, %s41
      %s30 = sphi 0, %s37
      %s31 = sphi 0, %s29
      %s32 = sphi 0, %s30
      %s33 = sphi 0, %s31
      %s34 = sphi 0, %s32
      %s46 = sphi 0, %s48
      %s49 = sphi 0, %s46
      %s50 = sphi 0, %s49
      %s66 = sphi 0, %s50
      %s74 = sphi 0, %s76
      %s77 = sphi 0, %s74
      %s78 = sphi 0, %s77
      %s94 = sphi 0, %s78
      %s102 = sphi 0, %s104
      %s105 = sphi 0, %s102
      %s106 = sphi 0, %s105
      %s122 = sphi 0, %s106
      %s130 = sphi 0, %s132
      %s133 = sphi 0, %s130
      %s134 = sphi 0, %s133
      %s150 = sphi 0, %s134
    $region4: #{tpu_custom_call.1} parent=1 // loop_header_branch
      %25 = sbr.rel (%p23) target = $region8
    $region5: #{tpu_custom_call.1} parent=1 // loop_body
      %s27 = ssub.s32 %s22, 1
      %s28 = ssub.s32 %s22, 2
      %s35 = sadd.s32 1, %s30
      %p36 = scmp.ge.s32.totalorder %s35, 1
      %s37 = scalar_select %p36, 0, %s35
      %s38 = sadd.s32 1, %s29
      %s39 = scalar_select %p36, %s38, %s29
      %p40 = scmp.ge.s32.totalorder %s39, 2
      %s41 = scalar_select %p40, 0, %s39
      %s42 = ssub.s32 %s29, %s41
      %s43 = ssub.s32 %s30, %s37
      %s44 = sor.u32 %s42, %s43
      %p45 = scmp.eq.s32.totalorder %s44, 0
      %s47 = sadd.s32 %s46, 1
      %s48 = scalar_select %p45, %s46, %s47
      %p51 = pneg %p45
      %p52 = scmp.eq.s32.totalorder %s22, 1
      %p53 = por %p51, %p52
      %p54 = scmp.ne.s32.totalorder %s46, %s49
      %p55 = scmp.eq.s32.totalorder %s22, 0
      %p56 = por %p54, %p55
      %p57 = scmp.ne.s32.totalorder %s46, %s49
      %p58 = scmp.eq.s32.totalorder %s27, 1
      %p59 = por %p57, %p58
      %p60 = scmp.ne.s32.totalorder %s49, %s50
      %p61 = scmp.eq.s32.totalorder %s27, 0
      %p62 = por %p60, %p61
      %p63 = scmp.ne.s32.totalorder %s49, %s50
      %p64 = scmp.eq.s32.totalorder %s28, 1
      %p65 = por %p63, %p64
      %p67 = scmp.ne.s32.totalorder %s50, %s66
      %p68 = scmp.eq.s32.totalorder %s28, 0
      %p69 = por %p67, %p68
      %s70 = ssub.s32 %s29, %s41
      %s71 = ssub.s32 %s30, %s37
      %s72 = sor.u32 %s70, %s71
      %p73 = scmp.eq.s32.totalorder %s72, 0
      %s75 = sadd.s32 %s74, 1
      %s76 = scalar_select %p73, %s74, %s75
      %p79 = pneg %p73
      %p80 = scmp.eq.s32.totalorder %s22, 1
      %p81 = por %p79, %p80
      %p82 = scmp.ne.s32.totalorder %s74, %s77
      %p83 = scmp.eq.s32.totalorder %s22, 0
      %p84 = por %p82, %p83
      %p85 = scmp.ne.s32.totalorder %s74, %s77
      %p86 = scmp.eq.s32.totalorder %s27, 1
      %p87 = por %p85, %p86
      %p88 = scmp.ne.s32.totalorder %s77, %s78
      %p89 = scmp.eq.s32.totalorder %s27, 0
      %p90 = por %p88, %p89
      %p91 = scmp.ne.s32.totalorder %s77, %s78
      %p92 = scmp.eq.s32.totalorder %s28, 1
      %p93 = por %p91, %p92
      %p95 = scmp.ne.s32.totalorder %s78, %s94
      %p96 = scmp.eq.s32.totalorder %s28, 0
      %p97 = por %p95, %p96
      %s98 = ssub.s32 %s29, %s41
      %s99 = ssub.s32 %s30, %s37
      %s100 = sor.u32 %s98, %s99
      %p101 = scmp.eq.s32.totalorder %s100, 0
      %s103 = sadd.s32 %s102, 1
      %s104 = scalar_select %p101, %s102, %s103
      %p107 = pneg %p101
      %p108 = scmp.eq.s32.totalorder %s22, 1
      %p109 = por %p107, %p108
      %p110 = scmp.ne.s32.totalorder %s102, %s105
      %p111 = scmp.eq.s32.totalorder %s22, 0
      %p112 = por %p110, %p111
      %p113 = scmp.ne.s32.totalorder %s102, %s105
      %p114 = scmp.eq.s32.totalorder %s27, 1
      %p115 = por %p113, %p114
      %p116 = scmp.ne.s32.totalorder %s105, %s106
      %p117 = scmp.eq.s32.totalorder %s27, 0
      %p118 = por %p116, %p117
      %p119 = scmp.ne.s32.totalorder %s105, %s106
      %p120 = scmp.eq.s32.totalorder %s28, 1
      %p121 = por %p119, %p120
      %p123 = scmp.ne.s32.totalorder %s106, %s122
      %p124 = scmp.eq.s32.totalorder %s28, 0
      %p125 = por %p123, %p124
      %s126 = ssub.s32 %s29, %s41
      %s127 = ssub.s32 %s30, %s37
      %s128 = sor.u32 %s126, %s127
      %p129 = scmp.eq.s32.totalorder %s128, 0
      %s131 = sadd.s32 %s130, 1
      %s132 = scalar_select %p129, %s130, %s131
      %p135 = pneg %p129
      %p136 = scmp.eq.s32.totalorder %s22, 1
      %p137 = por %p135, %p136
      %p138 = scmp.ne.s32.totalorder %s130, %s133
      %p139 = scmp.eq.s32.totalorder %s22, 0
      %p140 = por %p138, %p139
      %p141 = scmp.ne.s32.totalorder %s130, %s133
      %p142 = scmp.eq.s32.totalorder %s27, 1
      %p143 = por %p141, %p142
      %p144 = scmp.ne.s32.totalorder %s133, %s134
      %p145 = scmp.eq.s32.totalorder %s27, 0
      %p146 = por %p144, %p145
      %p147 = scmp.ne.s32.totalorder %s133, %s134
      %p148 = scmp.eq.s32.totalorder %s28, 1
      %p149 = por %p147, %p148
      %p151 = scmp.ne.s32.totalorder %s134, %s150
      %p152 = scmp.eq.s32.totalorder %s28, 0
      %p153 = por %p151, %p152
      %p154 = scmp.le.s32.totalorder 1, %s22
      %p155 = scmp.lt.s32.totalorder %s22, 3
      %p156 = pnand %p154, %p155
      %p157 = pneg %p156
      // Predicated region
      $region9: #{tpu_custom_call.1} parent=5 // pred_check
        _
      $region10: #{tpu_custom_call.1} parent=5 // pred_check_branch
        %159 = sbr.rel (%p156) target = $region12
      $region11: #{tpu_custom_call.1} parent=5 // pred_region
        %s160 = ssub.s32 %s22, 1
      $region12: #{tpu_custom_call.1} parent=5 // pred_fallthru
        _
      %p161 = scmp.lt.s32.totalorder %s22, 2
      // Predicated region
      $region13: #{tpu_custom_call.1} parent=5 // pred_check
        %p162 = pneg %p161
      $region14: #{tpu_custom_call.1} parent=5 // pred_check_branch
        %164 = sbr.rel (%p162) target = $region16
      $region15: #{tpu_custom_call.1} parent=5 // pred_region
        // Predicated region
        $region17: #{tpu_custom_call.1} parent=15 // pred_check
          %p165 = pneg %p56
        $region18: #{tpu_custom_call.1} parent=15 // pred_check_branch
          %167 = sbr.rel (%p165) target = $region20
        $region19: #{tpu_custom_call.1} parent=15 // pred_region
          %s168 = sand.u32 %s46, 1
          %s169 = scalar_lea.sflag [#allocation3], %s168
          %s170 = sand.u32 %s46, 1
          %s171 = smul.addr %s170, 4
          %s172 = scalar_lea.vmem [#allocation2], %s171
          %s173 = smul.u32 2, %s30
          %s175 = ssub.s32 64, 64
          %176 = vsyncadd %s169, %s175
          %s177 = smul.addr %s29, 4
          %s178 = sadd.s32 %s173, %s177
          %s179 = smul.addr %s178, 32
          %s180 = scalar_lea.hbm %s0, %s179
          %s182 = sshll.u32 %s172, 4
          %s183 = int_to_ptr.vmem [resolvable:$true] %s182
          %185 = dma.hbm_to_vmem [thread:$0]  %s180, 64, %s183, %s169
        $region20: #{tpu_custom_call.1} parent=15 // pred_fallthru
          _
        // Predicated region
        $region21: #{tpu_custom_call.1} parent=15 // pred_check
          %p186 = pneg %p84
        $region22: #{tpu_custom_call.1} parent=15 // pred_check_branch
          %188 = sbr.rel (%p186) target = $region24
        $region23: #{tpu_custom_call.1} parent=15 // pred_region
          %s189 = sand.u32 %s74, 1
          %s190 = scalar_lea.sflag [#allocation6], %s189
          %s191 = sand.u32 %s74, 1
          %s192 = smul.addr %s191, 4
          %s193 = scalar_lea.vmem [#allocation5], %s192
          %s194 = smul.u32 2, %s30
          %s196 = ssub.s32 64, 64
          %197 = vsyncadd %s190, %s196
          %s198 = sadd.s32 %s194, 2
          %s199 = smul.addr %s29, 4
          %s200 = sadd.s32 %s198, %s199
          %s201 = smul.addr %s200, 32
          %s202 = scalar_lea.hbm %s1, %s201
          %s204 = sshll.u32 %s193, 4
          %s205 = int_to_ptr.vmem [resolvable:$true] %s204
          %207 = dma.hbm_to_vmem [thread:$0]  %s202, 64, %s205, %s190
        $region24: #{tpu_custom_call.1} parent=15 // pred_fallthru
          _
      $region16: #{tpu_custom_call.1} parent=5 // pred_fallthru
        _
      %p208 = scmp.le.s32.totalorder 1, %s22
      %p209 = scmp.lt.s32.totalorder %s22, 3
      %p210 = pnand %p208, %p209
      %p211 = pneg %p210
      // Predicated region
      $region25: #{tpu_custom_call.1} parent=5 // pred_check
        _
      $region26: #{tpu_custom_call.1} parent=5 // pred_check_branch
        %213 = sbr.rel (%p210) target = $region28
      $region27: #{tpu_custom_call.1} parent=5 // pred_region
        %s214 = ssub.s32 %s22, 1
        %s215 = sand.u32 %s49, 1
        %s216 = scalar_lea.sflag [#allocation3], %s215
        %s217 = sand.u32 %s49, 1
        %s218 = smul.addr %s217, 4
        %s219 = scalar_lea.vmem [#allocation2], %s218
        // Predicated region
        $region29: #{tpu_custom_call.1} parent=27 // pred_check
          %p220 = pneg %p62
        $region30: #{tpu_custom_call.1} parent=27 // pred_check_branch
          %222 = sbr.rel (%p220) target = $region32
        $region31: #{tpu_custom_call.1} parent=27 // pred_region
          %223 = dma.done %s216, 64
        $region32: #{tpu_custom_call.1} parent=27 // pred_fallthru
          _
        %s224 = sand.u32 %s77, 1
        %s225 = scalar_lea.sflag [#allocation6], %s224
        %s226 = sand.u32 %s77, 1
        %s227 = smul.addr %s226, 4
        %s228 = scalar_lea.vmem [#allocation5], %s227
        // Predicated region
        $region33: #{tpu_custom_call.1} parent=27 // pred_check
          %p229 = pneg %p90
        $region34: #{tpu_custom_call.1} parent=27 // pred_check_branch
          %231 = sbr.rel (%p229) target = $region36
        $region35: #{tpu_custom_call.1} parent=27 // pred_region
          %232 = dma.done %s225, 64
        $region36: #{tpu_custom_call.1} parent=27 // pred_fallthru
          _
        %s233 = sand.u32 %s49, 1
        %s234 = scalar_lea.sflag [#allocation3], %s233
        %s235 = sand.u32 %s49, 1
        %s236 = smul.addr %s235, 4
        %s237 = scalar_lea.vmem [#allocation2], %s236
        %p238 = pneg %p62
        %p239 = pneg %p59
        %s240 = sand.u32 %s77, 1
        %s241 = scalar_lea.sflag [#allocation6], %s240
        %s242 = sand.u32 %s77, 1
        %s243 = smul.addr %s242, 4
        %s244 = scalar_lea.vmem [#allocation5], %s243
        %p245 = pneg %p90
        %p246 = pneg %p87
        %p247 = pneg %p118
        %p248 = pneg %p115
        %s249 = sand.u32 %s105, 1
        %s250 = scalar_lea.sflag [#allocation4], %s249
        %s251 = sand.u32 %s105, 1
        %s252 = smul.addr %s251, 4
        %s253 = scalar_lea.vmem [#allocation7], %s252
        %p254 = pneg %p146
        %p255 = pneg %p143
        %s256 = sand.u32 %s133, 1
        %s257 = scalar_lea.sflag [#allocation9], %s256
        %s258 = sand.u32 %s133, 1
        %s259 = smul.addr %s258, 4
        %s260 = scalar_lea.vmem [#allocation8], %s259
        %s261 = smul.u32 2, %s32
        %s262 = smul.u32 2, %s32
        %s263 = smul.u32 2, %s32
        %s264 = smul.u32 2, %s32
        %v265 = vld [vmem:[%s219] sm:$0xf]
        %266 = vst [vmem:[%s253] sm:$0xf] %v265
        %v267 = vld [vmem:[%s228] sm:$0xf]
        %268 = vst [vmem:[%s260] sm:$0xf] %v267
        %s269 = sand.u32 %s105, 1
        %s270 = scalar_lea.sflag [#allocation4], %s269
        %s271 = sand.u32 %s105, 1
        %s272 = smul.addr %s271, 4
        %s273 = scalar_lea.vmem [#allocation7], %s272
        %s274 = sand.u32 %s133, 1
        %s275 = scalar_lea.sflag [#allocation9], %s274
        %s276 = sand.u32 %s133, 1
        %s277 = smul.addr %s276, 4
        %s278 = scalar_lea.vmem [#allocation8], %s277
        // Predicated region
        $region37: #{tpu_custom_call.1} parent=27 // pred_check
          %p279 = pneg %p115
        $region38: #{tpu_custom_call.1} parent=27 // pred_check_branch
          %281 = sbr.rel (%p279) target = $region40
        $region39: #{tpu_custom_call.1} parent=27 // pred_region
          %s282 = smul.u32 2, %s32
          %s284 = ssub.s32 64, 64
          %285 = vsyncadd %s270, %s284
          %s286 = smul.addr %s31, 2
          %s287 = sadd.s32 %s282, %s286
          %s288 = smul.addr %s287, 32
          %s289 = scalar_lea.hbm %s2, %s288
          %s291 = sshll.u32 %s273, 4
          %s292 = int_to_ptr.vmem [resolvable:$true] %s291
          %294 = dma.vmem_to_hbm [thread:$0]  %s292, 64, %s289, %s270
        $region40: #{tpu_custom_call.1} parent=27 // pred_fallthru
          _
        // Predicated region
        $region41: #{tpu_custom_call.1} parent=27 // pred_check
          %p295 = pneg %p143
        $region42: #{tpu_custom_call.1} parent=27 // pred_check_branch
          %297 = sbr.rel (%p295) target = $region44
        $region43: #{tpu_custom_call.1} parent=27 // pred_region
          %s298 = smul.u32 2, %s32
          %s300 = ssub.s32 64, 64
          %301 = vsyncadd %s275, %s300
          %s302 = smul.addr %s31, 2
          %s303 = sadd.s32 %s298, %s302
          %s304 = smul.addr %s303, 32
          %s305 = scalar_lea.hbm %s3, %s304
          %s307 = sshll.u32 %s278, 4
          %s308 = int_to_ptr.vmem [resolvable:$true] %s307
          %310 = dma.vmem_to_hbm [thread:$0]  %s308, 64, %s305, %s275
        $region44: #{tpu_custom_call.1} parent=27 // pred_fallthru
          _
      $region28: #{tpu_custom_call.1} parent=5 // pred_fallthru
        _
      %p311 = scmp.le.s32.totalorder 2, %s22
      // Predicated region
      $region45: #{tpu_custom_call.1} parent=5 // pred_check
        %p312 = pneg %p311
      $region46: #{tpu_custom_call.1} parent=5 // pred_check_branch
        %314 = sbr.rel (%p312) target = $region48
      $region47: #{tpu_custom_call.1} parent=5 // pred_region
        %s315 = ssub.s32 %s22, 2
        // Predicated region
        $region49: #{tpu_custom_call.1} parent=47 // pred_check
          %p316 = pneg %p121
        $region50: #{tpu_custom_call.1} parent=47 // pred_check_branch
          %318 = sbr.rel (%p316) target = $region52
        $region51: #{tpu_custom_call.1} parent=47 // pred_region
          %s319 = sand.u32 %s106, 1
          %s320 = scalar_lea.sflag [#allocation4], %s319
          %s321 = sand.u32 %s106, 1
          %s322 = smul.addr %s321, 4
          %s323 = scalar_lea.vmem [#allocation7], %s322
          %324 = dma.done %s320, 64
        $region52: #{tpu_custom_call.1} parent=47 // pred_fallthru
          _
        // Predicated region
        $region53: #{tpu_custom_call.1} parent=47 // pred_check
          %p325 = pneg %p149
        $region54: #{tpu_custom_call.1} parent=47 // pred_check_branch
          %327 = sbr.rel (%p325) target = $region56
        $region55: #{tpu_custom_call.1} parent=47 // pred_region
          %s328 = sand.u32 %s134, 1
          %s329 = scalar_lea.sflag [#allocation9], %s328
          %s330 = sand.u32 %s134, 1
          %s331 = smul.addr %s330, 4
          %s332 = scalar_lea.vmem [#allocation8], %s331
          %333 = dma.done %s329, 64
        $region56: #{tpu_custom_call.1} parent=47 // pred_fallthru
          _
      $region48: #{tpu_custom_call.1} parent=5 // pred_fallthru
        _
    $region6: #{tpu_custom_call.1} parent=1 // loop_footer
      %s26 = sadd.s32 1, %s22
    $region7: #{tpu_custom_call.1} parent=1 // loop_footer_branch
      %21 = sbr.rel target = $region3
    $region8: #{tpu_custom_call.1} parent=1 // loop_exit
      _
    %334 = vsyncpa [#allocation3], 1
    %s335 = scalar_lea.sflag [#allocation3], 1
    %336 = vsyncpa %s335, 1
    %337 = vsyncpa [#allocation6], 1
    %s338 = scalar_lea.sflag [#allocation6], 1
    %339 = vsyncpa %s338, 1
    %340 = vsyncpa [#allocation4], 1
    %s341 = scalar_lea.sflag [#allocation4], 1
    %342 = vsyncpa %s341, 1
    %343 = vsyncpa [#allocation9], 1
    %s344 = scalar_lea.sflag [#allocation9], 1
    %345 = vsyncpa %s344, 1

</llo_original>
